<compile_context>
chip_gen: v5e
topology: v5e:2x2
jax: 0.10.0
libtpu: 0.0.40
codegen_flags: <defaults>
</compile_context>

<pallas_src>
import math

import jax
import jax.numpy as jnp
from jax.experimental import pallas as pl
from jax.experimental.pallas import tpu as pltpu

# ------------------------- model hyper-parameters ------------------------- #
B = 2          # batch
T = 8          # sequence length
D = 16         # input_dim
H = 32         # hidden_dim
NUM_LAYERS = 2
FC_MID = 64
OUT_DIM = 4    # output_dim
OUT_PAD = 128  # lane-dense padded output width (sliced back in the wrapper)


# ------------------------------- kernel ----------------------------------- #
def lstm_mlp_kernel(x_ref, wih0e_ref, bext_ref, wcomb_ref,
                    wfc1_ref, bfc1_ref, wfc2_ref, bfc2_ref,
                    out_ref):
    """Fused 2-layer LSTM wavefront + fc1/relu/fc2, all resident in VMEM."""
    b_sz = out_ref.shape[0]
    two_h = wcomb_ref.shape[0]            # 2H
    h_dim = two_h // 2
    t_len = x_ref.shape[0] // b_sz

    w_comb = wcomb_ref[...]               # (2H, 8H) hoisted read
    b_ext = bext_ref[...]                 # (1, 8H)

    # ---- hoisted layer-0 input projection for all timesteps, emitted
    #      directly in the interleaved 8H gate layout; layer-1 columns of
    #      b_ext carry the layer-1 bias so each step needs one add only.
    ext = (jnp.dot(x_ref[...], wih0e_ref[...],
                   preferred_element_type=jnp.float32)
           + b_ext)                        # (T*B, 8H)

    def cell(gates_all, c_all):
        # One sigmoid + one tanh over the full (B, 8H) gates, then contiguous
        # 2H-wide slices: columns are [i0 i1 | f0 f1 | g0 g1 | o0 o1].
        sg = jax.nn.sigmoid(gates_all)
        th = jnp.tanh(gates_all)
        i_all = sg[:, 0 * two_h:1 * two_h]
        f_all = sg[:, 1 * two_h:2 * two_h]
        g_all = th[:, 2 * two_h:3 * two_h]
        o_all = sg[:, 3 * two_h:4 * two_h]
        c_new = f_all * c_all + i_all * g_all
        h_new = o_all * jnp.tanh(c_new)    # h_new == [h0 | h1]
        return h_new, c_new

    # Lane mask selecting the layer-0 half of the fused state.
    l0_mask = (jax.lax.broadcasted_iota(jnp.int32, (b_sz, two_h), 1)
               < h_dim).astype(jnp.float32)

    # ---- t = 0: both states are zero so the recurrent matmul vanishes;
    #      layer 1 must not run yet, so its half is masked back to zero.
    h_all, c_all = cell(ext[0:b_sz, :],
                        jnp.zeros((b_sz, two_h), jnp.float32))
    h_all = h_all * l0_mask
    c_all = c_all * l0_mask

    # ---- wavefront steps t = 1..T-1: layer-0 step t and layer-1 step t-1
    #      share one (B, 2H) x (2H, 8H) matmul and one sigmoid/tanh pair.
    for t in range(1, t_len):
        gates_all = (jnp.dot(h_all, w_comb,
                             preferred_element_type=jnp.float32)
                     + ext[t * b_sz:(t + 1) * b_sz, :])
        h_all, c_all = cell(gates_all, c_all)

    # ---- final step: layer-1 step T-1 (the layer-0 half is computed but
    #      discarded — fc1's zero rows kill it).
    gates_all = (jnp.dot(h_all, w_comb, preferred_element_type=jnp.float32)
                 + b_ext)
    h_all, _ = cell(gates_all, c_all)

    # ---- head: fc1 (zero-padded over the layer-0 half of the fused state)
    #      -> relu -> fc2 (padded to 128 output lanes for a dense store).
    y = (jnp.dot(h_all, wfc1_ref[...], preferred_element_type=jnp.float32)
         + bfc1_ref[...])
    y = jnp.maximum(y, 0.0)                              # ReLU
    out = (jnp.dot(y, wfc2_ref[...], preferred_element_type=jnp.float32)
           + bfc2_ref[...])
    out_ref[...] = out.astype(out_ref.dtype)


# ------------------------------- wrapper ----------------------------------- #
def _interleave_gate_cols(a, b):
    """(rows, 4H) x (rows, 4H) -> (rows, 8H) with blocks [ia ib fa fb ga gb oa ob]."""
    rows = a.shape[0]
    a4 = a.reshape(rows, 4, H)
    b4 = b.reshape(rows, 4, H)
    return jnp.stack([a4, b4], axis=2).reshape(rows, 8 * H)


@jax.jit
def torch_rnn_forward(x, params):
    """x: (B, T, D) batch-first (PyTorch convention). Returns (B, OUT_DIM)."""
    (wih0, whh0, b0, wih1, whh1, b1, wfc1, bfc1, wfc2, bfc2) = params

    # Time-major, flattened to (T*B, D) so the kernel's hoisted input
    # projection is a single 2-D matmul with no in-kernel reshape.
    x_flat = jnp.transpose(x, (1, 0, 2)).reshape(T * B, D)

    # --- layout plumbing (wrapper-side only) ------------------------------ #
    # Combined recurrent weight: rows 0:H driven by h0, rows H:2H by h1;
    # columns interleaved per gate so the fused cell slices are contiguous.
    w_comb = jnp.concatenate(
        [_interleave_gate_cols(whh0, wih1),                       # h0 rows
         _interleave_gate_cols(jnp.zeros((H, 4 * H), jnp.float32), whh1)],
        axis=0)                                                   # (2H, 8H)
    # Layer-0 input weights in the same interleaved layout (layer-1 cols = 0).
    wih0_ext = _interleave_gate_cols(wih0, jnp.zeros((D, 4 * H), jnp.float32))
    # Fused bias: layer-0 bias in layer-0 columns, layer-1 bias in layer-1.
    b_ext = _interleave_gate_cols(b0, b1)                         # (1, 8H)
    # fc1 reads the fused state directly; zero rows over the layer-0 half.
    wfc1_ext = jnp.concatenate(
        [jnp.zeros((H, FC_MID), jnp.float32), wfc1], axis=0)      # (2H, 64)
    # Lane-dense output: pad fc2 to 128 output lanes; slice after the call.
    wfc2_p = jnp.zeros((FC_MID, OUT_PAD), jnp.float32).at[:, :OUT_DIM].set(wfc2)
    bfc2_p = jnp.zeros((1, OUT_PAD), jnp.float32).at[:, :OUT_DIM].set(bfc2)

    kernel_args = (x_flat, wih0_ext, b_ext, w_comb,
                   wfc1_ext, bfc1, wfc2_p, bfc2_p)
    vmem_spec = pl.BlockSpec(memory_space=pltpu.MemorySpace.VMEM)

    out_pad = pl.pallas_call(
        lstm_mlp_kernel,
        out_shape=jax.ShapeDtypeStruct((x.shape[0], OUT_PAD), jnp.float32),
        in_specs=[vmem_spec] * len(kernel_args),
        out_specs=vmem_spec,
    )(*kernel_args)
    return out_pad[:, :OUT_DIM]


# --------------------------- parameter init -------------------------------- #
def init_params(key):
    """Deterministic init matching nn.LSTM / nn.Linear shapes (transposed)."""
    keys = jax.random.split(key, 16)
    kk = iter(keys)
    bound_rnn = 1.0 / math.sqrt(H)

    def u(k, shape, bound):
        return jax.random.uniform(k, shape, jnp.float32, -bound, bound)

    # Layer 0: W_ih (4H, D), W_hh (4H, H), b_ih (4H,), b_hh (4H,)
    wih0 = u(next(kk), (4 * H, D), bound_rnn).T          # (D, 4H)
    whh0 = u(next(kk), (4 * H, H), bound_rnn).T          # (H, 4H)
    b0 = (u(next(kk), (4 * H,), bound_rnn)
          + u(next(kk), (4 * H,), bound_rnn)).reshape(1, 4 * H)
    # Layer 1: W_ih (4H, H), W_hh (4H, H)
    wih1 = u(next(kk), (4 * H, H), bound_rnn).T          # (H, 4H)
    whh1 = u(next(kk), (4 * H, H), bound_rnn).T          # (H, 4H)
    b1 = (u(next(kk), (4 * H,), bound_rnn)
          + u(next(kk), (4 * H,), bound_rnn)).reshape(1, 4 * H)
    # fc1: (64, H), fc2: (OUT_DIM, 64)
    b_fc1 = 1.0 / math.sqrt(H)
    wfc1 = u(next(kk), (FC_MID, H), b_fc1).T             # (H, 64)
    bfc1 = u(next(kk), (FC_MID,), b_fc1).reshape(1, FC_MID)
    b_fc2 = 1.0 / math.sqrt(FC_MID)
    wfc2 = u(next(kk), (OUT_DIM, FC_MID), b_fc2).T       # (64, OUT_DIM)
    bfc2 = u(next(kk), (OUT_DIM,), b_fc2).reshape(1, OUT_DIM)

    return (wih0, whh0, b0, wih1, whh1, b1, wfc1, bfc1, wfc2, bfc2)


# --------------------------- pure-JAX reference ----------------------------- #
def reference_forward(x, params):
    (wih0, whh0, b0, wih1, whh1, b1, wfc1, bfc1, wfc2, bfc2) = params

    def run_layer(seq, wih, whh, bias):
        h = jnp.zeros((seq.shape[0], H), jnp.float32)
        c = jnp.zeros((seq.shape[0], H), jnp.float32)
        outs = []
        for t in range(seq.shape[1]):
            gates = seq[:, t, :] @ wih + h @ whh + bias
            i_g = jax.nn.sigmoid(gates[:, 0 * H:1 * H])
            f_g = jax.nn.sigmoid(gates[:, 1 * H:2 * H])
            g_g = jnp.tanh(gates[:, 2 * H:3 * H])
            o_g = jax.nn.sigmoid(gates[:, 3 * H:4 * H])
            c = f_g * c + i_g * g_g
            h = o_g * jnp.tanh(c)
            outs.append(h)
        return jnp.stack(outs, axis=1), h

    seq1, _ = run_layer(x, wih0, whh0, b0)
    _, h_last = run_layer(seq1, wih1, whh1, b1)
    y = jnp.maximum(h_last @ wfc1 + bfc1, 0.0)
    return y @ wfc2 + bfc2


# ---------------------------------- main ------------------------------------ #
if __name__ == "__main__":
    key = jax.random.PRNGKey(0)
    k_x, k_p = jax.random.split(key)
    x = jax.random.normal(k_x, (B, T, D), jnp.float32)
    params = init_params(k_p)

    out = torch_rnn_forward(x, params)
    out = jax.block_until_ready(out)

    ref = reference_forward(x, params)
    assert out.shape == (B, OUT_DIM)
    assert jnp.allclose(out, ref, atol=1e-4, rtol=1e-4), "mismatch vs reference"

    print("KERNEL_OK")
</pallas_src>

<mosaic_0001>
module attributes {stable_mosaic.version = 11 : i64} {
  func.func @lstm_mlp_kernel(%arg0: memref<16x16xf32, #tpu.memory_space<vmem>>, %arg1: memref<16x256xf32, #tpu.memory_space<vmem>>, %arg2: memref<1x256xf32, #tpu.memory_space<vmem>>, %arg3: memref<64x256xf32, #tpu.memory_space<vmem>>, %arg4: memref<64x64xf32, #tpu.memory_space<vmem>>, %arg5: memref<1x64xf32, #tpu.memory_space<vmem>>, %arg6: memref<64x128xf32, #tpu.memory_space<vmem>>, %arg7: memref<1x128xf32, #tpu.memory_space<vmem>>, %arg8: memref<2x128xf32, #tpu.memory_space<vmem>>) attributes {dimension_semantics = [], scalar_prefetch = 0 : i64, scratch_operands = 0 : i64, tpu.core_type = #tpu.core_type<tc>} {
    %c0 = arith.constant 0 : index
    %c0_0 = arith.constant 0 : index
    %0 = vector.load %arg3[%c0, %c0_0] : memref<64x256xf32, #tpu.memory_space<vmem>>, vector<64x256xf32>
    %c0_1 = arith.constant 0 : index
    %c0_2 = arith.constant 0 : index
    %1 = vector.load %arg2[%c0_1, %c0_2] : memref<1x256xf32, #tpu.memory_space<vmem>>, vector<1x256xf32>
    %c0_3 = arith.constant 0 : index
    %c0_4 = arith.constant 0 : index
    %2 = vector.load %arg0[%c0_3, %c0_4] : memref<16x16xf32, #tpu.memory_space<vmem>>, vector<16x16xf32>
    %c0_5 = arith.constant 0 : index
    %c0_6 = arith.constant 0 : index
    %3 = vector.load %arg1[%c0_5, %c0_6] : memref<16x256xf32, #tpu.memory_space<vmem>>, vector<16x256xf32>
    %cst = arith.constant dense<0.000000e+00> : vector<16x256xf32>
    %4 = tpu.matmul %2, %3, %cst {dimension_numbers = #tpu.dot_dimension_numbers<[1], [0], [0], [1], [0, 0, 1, 1], [], []>} : vector<16x16xf32>, vector<16x256xf32>, vector<16x256xf32> -> vector<16x256xf32>
    %5 = vector.broadcast %1 : vector<1x256xf32> to vector<16x256xf32>
    %6 = arith.addf %4, %5 : vector<16x256xf32>
    %7 = tpu.iota {dimensions = array<i32: 1>} : vector<2x64xi32>
    %c32_i32 = arith.constant 32 : i32
    %8 = vector.broadcast %c32_i32 : i32 to vector<2x64xi32>
    %9 = arith.cmpi slt, %7, %8 : vector<2x64xi32>
    %10 = arith.extui %9 : vector<2x64xi1> to vector<2x64xi32>
    %11 = arith.sitofp %10 : vector<2x64xi32> to vector<2x64xf32>
    %12 = vector.extract_strided_slice %6 {offsets = [0, 0], sizes = [2, 256], strides = [1, 1]} : vector<16x256xf32> to vector<2x256xf32>
    %cst_7 = arith.constant 0.000000e+00 : f32
    %13 = vector.broadcast %cst_7 : f32 to vector<2x64xf32>
    %14 = arith.negf %12 : vector<2x256xf32>
    %15 = math.exp %14 : vector<2x256xf32>
    %cst_8 = arith.constant 1.000000e+00 : f32
    %16 = vector.broadcast %cst_8 : f32 to vector<2x256xf32>
    %17 = arith.addf %16, %15 : vector<2x256xf32>
    %18 = arith.divf %16, %17 : vector<2x256xf32>
    %19 = math.tanh %12 : vector<2x256xf32>
    %20 = vector.extract_strided_slice %18 {offsets = [0, 0], sizes = [2, 64], strides = [1, 1]} : vector<2x256xf32> to vector<2x64xf32>
    %21 = vector.extract_strided_slice %18 {offsets = [0, 64], sizes = [2, 64], strides = [1, 1]} : vector<2x256xf32> to vector<2x64xf32>
    %22 = vector.extract_strided_slice %19 {offsets = [0, 128], sizes = [2, 64], strides = [1, 1]} : vector<2x256xf32> to vector<2x64xf32>
    %23 = vector.extract_strided_slice %18 {offsets = [0, 192], sizes = [2, 64], strides = [1, 1]} : vector<2x256xf32> to vector<2x64xf32>
    %24 = arith.mulf %21, %13 : vector<2x64xf32>
    %25 = arith.mulf %20, %22 : vector<2x64xf32>
    %26 = arith.addf %24, %25 : vector<2x64xf32>
    %27 = math.tanh %26 : vector<2x64xf32>
    %28 = arith.mulf %23, %27 : vector<2x64xf32>
    %29 = arith.mulf %28, %11 : vector<2x64xf32>
    %30 = arith.mulf %26, %11 : vector<2x64xf32>
    %cst_9 = arith.constant dense<0.000000e+00> : vector<2x256xf32>
    %31 = tpu.matmul %29, %0, %cst_9 {dimension_numbers = #tpu.dot_dimension_numbers<[1], [0], [0], [1], [0, 0, 1, 1], [], []>} : vector<2x64xf32>, vector<64x256xf32>, vector<2x256xf32> -> vector<2x256xf32>
    %32 = vector.extract_strided_slice %6 {offsets = [2, 0], sizes = [2, 256], strides = [1, 1]} : vector<16x256xf32> to vector<2x256xf32>
    %33 = arith.addf %31, %32 : vector<2x256xf32>
    %34 = arith.negf %33 : vector<2x256xf32>
    %35 = math.exp %34 : vector<2x256xf32>
    %cst_10 = arith.constant 1.000000e+00 : f32
    %36 = vector.broadcast %cst_10 : f32 to vector<2x256xf32>
    %37 = arith.addf %36, %35 : vector<2x256xf32>
    %38 = arith.divf %36, %37 : vector<2x256xf32>
    %39 = math.tanh %33 : vector<2x256xf32>
    %40 = vector.extract_strided_slice %38 {offsets = [0, 0], sizes = [2, 64], strides = [1, 1]} : vector<2x256xf32> to vector<2x64xf32>
    %41 = vector.extract_strided_slice %38 {offsets = [0, 64], sizes = [2, 64], strides = [1, 1]} : vector<2x256xf32> to vector<2x64xf32>
    %42 = vector.extract_strided_slice %39 {offsets = [0, 128], sizes = [2, 64], strides = [1, 1]} : vector<2x256xf32> to vector<2x64xf32>
    %43 = vector.extract_strided_slice %38 {offsets = [0, 192], sizes = [2, 64], strides = [1, 1]} : vector<2x256xf32> to vector<2x64xf32>
    %44 = arith.mulf %41, %30 : vector<2x64xf32>
    %45 = arith.mulf %40, %42 : vector<2x64xf32>
    %46 = arith.addf %44, %45 : vector<2x64xf32>
    %47 = math.tanh %46 : vector<2x64xf32>
    %48 = arith.mulf %43, %47 : vector<2x64xf32>
    %cst_11 = arith.constant dense<0.000000e+00> : vector<2x256xf32>
    %49 = tpu.matmul %48, %0, %cst_11 {dimension_numbers = #tpu.dot_dimension_numbers<[1], [0], [0], [1], [0, 0, 1, 1], [], []>} : vector<2x64xf32>, vector<64x256xf32>, vector<2x256xf32> -> vector<2x256xf32>
    %50 = vector.extract_strided_slice %6 {offsets = [4, 0], sizes = [2, 256], strides = [1, 1]} : vector<16x256xf32> to vector<2x256xf32>
    %51 = arith.addf %49, %50 : vector<2x256xf32>
    %52 = arith.negf %51 : vector<2x256xf32>
    %53 = math.exp %52 : vector<2x256xf32>
    %cst_12 = arith.constant 1.000000e+00 : f32
    %54 = vector.broadcast %cst_12 : f32 to vector<2x256xf32>
    %55 = arith.addf %54, %53 : vector<2x256xf32>
    %56 = arith.divf %54, %55 : vector<2x256xf32>
    %57 = math.tanh %51 : vector<2x256xf32>
    %58 = vector.extract_strided_slice %56 {offsets = [0, 0], sizes = [2, 64], strides = [1, 1]} : vector<2x256xf32> to vector<2x64xf32>
    %59 = vector.extract_strided_slice %56 {offsets = [0, 64], sizes = [2, 64], strides = [1, 1]} : vector<2x256xf32> to vector<2x64xf32>
    %60 = vector.extract_strided_slice %57 {offsets = [0, 128], sizes = [2, 64], strides = [1, 1]} : vector<2x256xf32> to vector<2x64xf32>
    %61 = vector.extract_strided_slice %56 {offsets = [0, 192], sizes = [2, 64], strides = [1, 1]} : vector<2x256xf32> to vector<2x64xf32>
    %62 = arith.mulf %59, %46 : vector<2x64xf32>
    %63 = arith.mulf %58, %60 : vector<2x64xf32>
    %64 = arith.addf %62, %63 : vector<2x64xf32>
    %65 = math.tanh %64 : vector<2x64xf32>
    %66 = arith.mulf %61, %65 : vector<2x64xf32>
    %cst_13 = arith.constant dense<0.000000e+00> : vector<2x256xf32>
    %67 = tpu.matmul %66, %0, %cst_13 {dimension_numbers = #tpu.dot_dimension_numbers<[1], [0], [0], [1], [0, 0, 1, 1], [], []>} : vector<2x64xf32>, vector<64x256xf32>, vector<2x256xf32> -> vector<2x256xf32>
    %68 = vector.extract_strided_slice %6 {offsets = [6, 0], sizes = [2, 256], strides = [1, 1]} : vector<16x256xf32> to vector<2x256xf32>
    %69 = arith.addf %67, %68 : vector<2x256xf32>
    %70 = arith.negf %69 : vector<2x256xf32>
    %71 = math.exp %70 : vector<2x256xf32>
    %cst_14 = arith.constant 1.000000e+00 : f32
    %72 = vector.broadcast %cst_14 : f32 to vector<2x256xf32>
    %73 = arith.addf %72, %71 : vector<2x256xf32>
    %74 = arith.divf %72, %73 : vector<2x256xf32>
    %75 = math.tanh %69 : vector<2x256xf32>
    %76 = vector.extract_strided_slice %74 {offsets = [0, 0], sizes = [2, 64], strides = [1, 1]} : vector<2x256xf32> to vector<2x64xf32>
    %77 = vector.extract_strided_slice %74 {offsets = [0, 64], sizes = [2, 64], strides = [1, 1]} : vector<2x256xf32> to vector<2x64xf32>
    %78 = vector.extract_strided_slice %75 {offsets = [0, 128], sizes = [2, 64], strides = [1, 1]} : vector<2x256xf32> to vector<2x64xf32>
    %79 = vector.extract_strided_slice %74 {offsets = [0, 192], sizes = [2, 64], strides = [1, 1]} : vector<2x256xf32> to vector<2x64xf32>
    %80 = arith.mulf %77, %64 : vector<2x64xf32>
    %81 = arith.mulf %76, %78 : vector<2x64xf32>
    %82 = arith.addf %80, %81 : vector<2x64xf32>
    %83 = math.tanh %82 : vector<2x64xf32>
    %84 = arith.mulf %79, %83 : vector<2x64xf32>
    %cst_15 = arith.constant dense<0.000000e+00> : vector<2x256xf32>
    %85 = tpu.matmul %84, %0, %cst_15 {dimension_numbers = #tpu.dot_dimension_numbers<[1], [0], [0], [1], [0, 0, 1, 1], [], []>} : vector<2x64xf32>, vector<64x256xf32>, vector<2x256xf32> -> vector<2x256xf32>
    %86 = vector.extract_strided_slice %6 {offsets = [8, 0], sizes = [2, 256], strides = [1, 1]} : vector<16x256xf32> to vector<2x256xf32>
    %87 = arith.addf %85, %86 : vector<2x256xf32>
    %88 = arith.negf %87 : vector<2x256xf32>
    %89 = math.exp %88 : vector<2x256xf32>
    %cst_16 = arith.constant 1.000000e+00 : f32
    %90 = vector.broadcast %cst_16 : f32 to vector<2x256xf32>
    %91 = arith.addf %90, %89 : vector<2x256xf32>
    %92 = arith.divf %90, %91 : vector<2x256xf32>
    %93 = math.tanh %87 : vector<2x256xf32>
    %94 = vector.extract_strided_slice %92 {offsets = [0, 0], sizes = [2, 64], strides = [1, 1]} : vector<2x256xf32> to vector<2x64xf32>
    %95 = vector.extract_strided_slice %92 {offsets = [0, 64], sizes = [2, 64], strides = [1, 1]} : vector<2x256xf32> to vector<2x64xf32>
    %96 = vector.extract_strided_slice %93 {offsets = [0, 128], sizes = [2, 64], strides = [1, 1]} : vector<2x256xf32> to vector<2x64xf32>
    %97 = vector.extract_strided_slice %92 {offsets = [0, 192], sizes = [2, 64], strides = [1, 1]} : vector<2x256xf32> to vector<2x64xf32>
    %98 = arith.mulf %95, %82 : vector<2x64xf32>
    %99 = arith.mulf %94, %96 : vector<2x64xf32>
    %100 = arith.addf %98, %99 : vector<2x64xf32>
    %101 = math.tanh %100 : vector<2x64xf32>
    %102 = arith.mulf %97, %101 : vector<2x64xf32>
    %cst_17 = arith.constant dense<0.000000e+00> : vector<2x256xf32>
    %103 = tpu.matmul %102, %0, %cst_17 {dimension_numbers = #tpu.dot_dimension_numbers<[1], [0], [0], [1], [0, 0, 1, 1], [], []>} : vector<2x64xf32>, vector<64x256xf32>, vector<2x256xf32> -> vector<2x256xf32>
    %104 = vector.extract_strided_slice %6 {offsets = [10, 0], sizes = [2, 256], strides = [1, 1]} : vector<16x256xf32> to vector<2x256xf32>
    %105 = arith.addf %103, %104 : vector<2x256xf32>
    %106 = arith.negf %105 : vector<2x256xf32>
    %107 = math.exp %106 : vector<2x256xf32>
    %cst_18 = arith.constant 1.000000e+00 : f32
    %108 = vector.broadcast %cst_18 : f32 to vector<2x256xf32>
    %109 = arith.addf %108, %107 : vector<2x256xf32>
    %110 = arith.divf %108, %109 : vector<2x256xf32>
    %111 = math.tanh %105 : vector<2x256xf32>
    %112 = vector.extract_strided_slice %110 {offsets = [0, 0], sizes = [2, 64], strides = [1, 1]} : vector<2x256xf32> to vector<2x64xf32>
    %113 = vector.extract_strided_slice %110 {offsets = [0, 64], sizes = [2, 64], strides = [1, 1]} : vector<2x256xf32> to vector<2x64xf32>
    %114 = vector.extract_strided_slice %111 {offsets = [0, 128], sizes = [2, 64], strides = [1, 1]} : vector<2x256xf32> to vector<2x64xf32>
    %115 = vector.extract_strided_slice %110 {offsets = [0, 192], sizes = [2, 64], strides = [1, 1]} : vector<2x256xf32> to vector<2x64xf32>
    %116 = arith.mulf %113, %100 : vector<2x64xf32>
    %117 = arith.mulf %112, %114 : vector<2x64xf32>
    %118 = arith.addf %116, %117 : vector<2x64xf32>
    %119 = math.tanh %118 : vector<2x64xf32>
    %120 = arith.mulf %115, %119 : vector<2x64xf32>
    %cst_19 = arith.constant dense<0.000000e+00> : vector<2x256xf32>
    %121 = tpu.matmul %120, %0, %cst_19 {dimension_numbers = #tpu.dot_dimension_numbers<[1], [0], [0], [1], [0, 0, 1, 1], [], []>} : vector<2x64xf32>, vector<64x256xf32>, vector<2x256xf32> -> vector<2x256xf32>
    %122 = vector.extract_strided_slice %6 {offsets = [12, 0], sizes = [2, 256], strides = [1, 1]} : vector<16x256xf32> to vector<2x256xf32>
    %123 = arith.addf %121, %122 : vector<2x256xf32>
    %124 = arith.negf %123 : vector<2x256xf32>
    %125 = math.exp %124 : vector<2x256xf32>
    %cst_20 = arith.constant 1.000000e+00 : f32
    %126 = vector.broadcast %cst_20 : f32 to vector<2x256xf32>
    %127 = arith.addf %126, %125 : vector<2x256xf32>
    %128 = arith.divf %126, %127 : vector<2x256xf32>
    %129 = math.tanh %123 : vector<2x256xf32>
    %130 = vector.extract_strided_slice %128 {offsets = [0, 0], sizes = [2, 64], strides = [1, 1]} : vector<2x256xf32> to vector<2x64xf32>
    %131 = vector.extract_strided_slice %128 {offsets = [0, 64], sizes = [2, 64], strides = [1, 1]} : vector<2x256xf32> to vector<2x64xf32>
    %132 = vector.extract_strided_slice %129 {offsets = [0, 128], sizes = [2, 64], strides = [1, 1]} : vector<2x256xf32> to vector<2x64xf32>
    %133 = vector.extract_strided_slice %128 {offsets = [0, 192], sizes = [2, 64], strides = [1, 1]} : vector<2x256xf32> to vector<2x64xf32>
    %134 = arith.mulf %131, %118 : vector<2x64xf32>
    %135 = arith.mulf %130, %132 : vector<2x64xf32>
    %136 = arith.addf %134, %135 : vector<2x64xf32>
    %137 = math.tanh %136 : vector<2x64xf32>
    %138 = arith.mulf %133, %137 : vector<2x64xf32>
    %cst_21 = arith.constant dense<0.000000e+00> : vector<2x256xf32>
    %139 = tpu.matmul %138, %0, %cst_21 {dimension_numbers = #tpu.dot_dimension_numbers<[1], [0], [0], [1], [0, 0, 1, 1], [], []>} : vector<2x64xf32>, vector<64x256xf32>, vector<2x256xf32> -> vector<2x256xf32>
    %140 = vector.extract_strided_slice %6 {offsets = [14, 0], sizes = [2, 256], strides = [1, 1]} : vector<16x256xf32> to vector<2x256xf32>
    %141 = arith.addf %139, %140 : vector<2x256xf32>
    %142 = arith.negf %141 : vector<2x256xf32>
    %143 = math.exp %142 : vector<2x256xf32>
    %cst_22 = arith.constant 1.000000e+00 : f32
    %144 = vector.broadcast %cst_22 : f32 to vector<2x256xf32>
    %145 = arith.addf %144, %143 : vector<2x256xf32>
    %146 = arith.divf %144, %145 : vector<2x256xf32>
    %147 = math.tanh %141 : vector<2x256xf32>
    %148 = vector.extract_strided_slice %146 {offsets = [0, 0], sizes = [2, 64], strides = [1, 1]} : vector<2x256xf32> to vector<2x64xf32>
    %149 = vector.extract_strided_slice %146 {offsets = [0, 64], sizes = [2, 64], strides = [1, 1]} : vector<2x256xf32> to vector<2x64xf32>
    %150 = vector.extract_strided_slice %147 {offsets = [0, 128], sizes = [2, 64], strides = [1, 1]} : vector<2x256xf32> to vector<2x64xf32>
    %151 = vector.extract_strided_slice %146 {offsets = [0, 192], sizes = [2, 64], strides = [1, 1]} : vector<2x256xf32> to vector<2x64xf32>
    %152 = arith.mulf %149, %136 : vector<2x64xf32>
    %153 = arith.mulf %148, %150 : vector<2x64xf32>
    %154 = arith.addf %152, %153 : vector<2x64xf32>
    %155 = math.tanh %154 : vector<2x64xf32>
    %156 = arith.mulf %151, %155 : vector<2x64xf32>
    %cst_23 = arith.constant dense<0.000000e+00> : vector<2x256xf32>
    %157 = tpu.matmul %156, %0, %cst_23 {dimension_numbers = #tpu.dot_dimension_numbers<[1], [0], [0], [1], [0, 0, 1, 1], [], []>} : vector<2x64xf32>, vector<64x256xf32>, vector<2x256xf32> -> vector<2x256xf32>
    %158 = vector.broadcast %1 : vector<1x256xf32> to vector<2x256xf32>
    %159 = arith.addf %157, %158 : vector<2x256xf32>
    %160 = arith.negf %159 : vector<2x256xf32>
    %161 = math.exp %160 : vector<2x256xf32>
    %cst_24 = arith.constant 1.000000e+00 : f32
    %162 = vector.broadcast %cst_24 : f32 to vector<2x256xf32>
    %163 = arith.addf %162, %161 : vector<2x256xf32>
    %164 = arith.divf %162, %163 : vector<2x256xf32>
    %165 = math.tanh %159 : vector<2x256xf32>
    %166 = vector.extract_strided_slice %164 {offsets = [0, 0], sizes = [2, 64], strides = [1, 1]} : vector<2x256xf32> to vector<2x64xf32>
    %167 = vector.extract_strided_slice %164 {offsets = [0, 64], sizes = [2, 64], strides = [1, 1]} : vector<2x256xf32> to vector<2x64xf32>
    %168 = vector.extract_strided_slice %165 {offsets = [0, 128], sizes = [2, 64], strides = [1, 1]} : vector<2x256xf32> to vector<2x64xf32>
    %169 = vector.extract_strided_slice %164 {offsets = [0, 192], sizes = [2, 64], strides = [1, 1]} : vector<2x256xf32> to vector<2x64xf32>
    %170 = arith.mulf %167, %154 : vector<2x64xf32>
    %171 = arith.mulf %166, %168 : vector<2x64xf32>
    %172 = arith.addf %170, %171 : vector<2x64xf32>
    %173 = math.tanh %172 : vector<2x64xf32>
    %174 = arith.mulf %169, %173 : vector<2x64xf32>
    %c0_25 = arith.constant 0 : index
    %c0_26 = arith.constant 0 : index
    %175 = vector.load %arg4[%c0_25, %c0_26] : memref<64x64xf32, #tpu.memory_space<vmem>>, vector<64x64xf32>
    %cst_27 = arith.constant dense<0.000000e+00> : vector<2x64xf32>
    %176 = tpu.matmul %174, %175, %cst_27 {dimension_numbers = #tpu.dot_dimension_numbers<[1], [0], [0], [1], [0, 0, 1, 1], [], []>} : vector<2x64xf32>, vector<64x64xf32>, vector<2x64xf32> -> vector<2x64xf32>
    %c0_28 = arith.constant 0 : index
    %c0_29 = arith.constant 0 : index
    %177 = vector.load %arg5[%c0_28, %c0_29] : memref<1x64xf32, #tpu.memory_space<vmem>>, vector<1x64xf32>
    %178 = vector.broadcast %177 : vector<1x64xf32> to vector<2x64xf32>
    %179 = arith.addf %176, %178 : vector<2x64xf32>
    %cst_30 = arith.constant 0.000000e+00 : f32
    %180 = vector.broadcast %cst_30 : f32 to vector<2x64xf32>
    %181 = arith.maximumf %179, %180 : vector<2x64xf32>
    %c0_31 = arith.constant 0 : index
    %c0_32 = arith.constant 0 : index
    %182 = vector.load %arg6[%c0_31, %c0_32] : memref<64x128xf32, #tpu.memory_space<vmem>>, vector<64x128xf32>
    %cst_33 = arith.constant dense<0.000000e+00> : vector<2x128xf32>
    %183 = tpu.matmul %181, %182, %cst_33 {dimension_numbers = #tpu.dot_dimension_numbers<[1], [0], [0], [1], [0, 0, 1, 1], [], []>} : vector<2x64xf32>, vector<64x128xf32>, vector<2x128xf32> -> vector<2x128xf32>
    %c0_34 = arith.constant 0 : index
    %c0_35 = arith.constant 0 : index
    %184 = vector.load %arg7[%c0_34, %c0_35] : memref<1x128xf32, #tpu.memory_space<vmem>>, vector<1x128xf32>
    %185 = vector.broadcast %184 : vector<1x128xf32> to vector<2x128xf32>
    %186 = arith.addf %183, %185 : vector<2x128xf32>
    %c0_36 = arith.constant 0 : index
    %c0_37 = arith.constant 0 : index
    %187 = vector.load %arg8[%c0_36, %c0_37] : memref<2x128xf32, #tpu.memory_space<vmem>>, vector<2x128xf32>
    tpu.vector_store %arg8[%c0_36, %c0_37], %186 {strides = array<i32>} : memref<2x128xf32, #tpu.memory_space<vmem>>, vector<2x128xf32>,
    return
  }
}

</mosaic_0001>

<llo_original>
// kernel: torch_rnn_forward.1
$region0: #{torch_rnn_forward.1}
  #allocation0 [shape = 'u32[]', space=smem, size = 0x4, offset = 0x4, fixed_abs, tag = 'smem constant byte address 0x4 - core index']
  #allocation1 [shape = 'u32[72,128]{1,0:T(1,128)}', space=vmem, size = 0x9000, scoped, tag = 'internal scratch']
  %s0 = inlined_call_operand.vmem [shape: f32[16,16], index: 0, kind: input, shape index: {}]
  %s1 = inlined_call_operand.vmem [shape: f32[16,256], index: 1, kind: input, shape index: {}]
  %s2 = inlined_call_operand.vmem [shape: f32[1,256], index: 2, kind: input, shape index: {}]
  %s3 = inlined_call_operand.vmem [shape: f32[64,256], index: 3, kind: input, shape index: {}]
  %s4 = inlined_call_operand.vmem [shape: f32[64,64], index: 4, kind: input, shape index: {}]
  %s5 = inlined_call_operand.vmem [shape: f32[1,64], index: 5, kind: input, shape index: {}]
  %s6 = inlined_call_operand.vmem [shape: f32[64,128], index: 6, kind: input, shape index: {}]
  %s7 = inlined_call_operand.vmem [shape: f32[1,128], index: 7, kind: input, shape index: {}]
  %s8 = inlined_call_operand.hbm [shape: f32[2,128], index: 8, kind: output, shape index: {}]
  %s9 = sld [smem:[#allocation0]]
  $region42: #{torch_rnn_forward.1} parent=0
    _
  %s11 = ssub.s32 1, %s9
  %s12 = scalar_select 0, %s11, %s9
  $region1: #{torch_rnn_forward.1} parent=0
    #allocation2 [shape = 'u8[1024]{0}', space=vmem, size = 0x400, scoped, tag = 'output window, operand 0, single buffered']
    #allocation3 [shape = 's32[1]{0}', space=sflag, size = 0x4, scoped, tag = 'scoped memory for torch_rnn_forward.1']
    %13 = vsyncpa [#allocation3], 0
    // Predicated region
    $region2: #{torch_rnn_forward.1} parent=1 // pred_check
      _
    $region3: #{torch_rnn_forward.1} parent=1 // pred_check_branch
      %15 = sbr.rel (0) target = $region5
    $region4: #{torch_rnn_forward.1} parent=1 // pred_region
      _
    $region5: #{torch_rnn_forward.1} parent=1 // pred_fallthru
      _
    // Predicated region
    $region6: #{torch_rnn_forward.1} parent=1 // pred_check
      _
    $region7: #{torch_rnn_forward.1} parent=1 // pred_check_branch
      %17 = sbr.rel (0) target = $region9
    $region8: #{torch_rnn_forward.1} parent=1 // pred_region
      _
    $region9: #{torch_rnn_forward.1} parent=1 // pred_fallthru
      _
    // Predicated region
    $region10: #{torch_rnn_forward.1} parent=1 // pred_check
      _
    $region11: #{torch_rnn_forward.1} parent=1 // pred_check_branch
      %19 = sbr.rel (0) target = $region13
    $region12: #{torch_rnn_forward.1} parent=1 // pred_region
      _
    $region13: #{torch_rnn_forward.1} parent=1 // pred_fallthru
      _
    // Predicated region
    $region14: #{torch_rnn_forward.1} parent=1 // pred_check
      _
    $region15: #{torch_rnn_forward.1} parent=1 // pred_check_branch
      %21 = sbr.rel (0) target = $region17
    $region16: #{torch_rnn_forward.1} parent=1 // pred_region
      _
    $region17: #{torch_rnn_forward.1} parent=1 // pred_fallthru
      _
    // Predicated region
    $region18: #{torch_rnn_forward.1} parent=1 // pred_check
      _
    $region19: #{torch_rnn_forward.1} parent=1 // pred_check_branch
      %23 = sbr.rel (0) target = $region21
    $region20: #{torch_rnn_forward.1} parent=1 // pred_region
      _
    $region21: #{torch_rnn_forward.1} parent=1 // pred_fallthru
      _
    // Predicated region
    $region22: #{torch_rnn_forward.1} parent=1 // pred_check
      _
    $region23: #{torch_rnn_forward.1} parent=1 // pred_check_branch
      %25 = sbr.rel (0) target = $region25
    $region24: #{torch_rnn_forward.1} parent=1 // pred_region
      _
    $region25: #{torch_rnn_forward.1} parent=1 // pred_fallthru
      _
    // Predicated region
    $region26: #{torch_rnn_forward.1} parent=1 // pred_check
      _
    $region27: #{torch_rnn_forward.1} parent=1 // pred_check_branch
      %27 = sbr.rel (0) target = $region29
    $region28: #{torch_rnn_forward.1} parent=1 // pred_region
      _
    $region29: #{torch_rnn_forward.1} parent=1 // pred_fallthru
      _
    // Predicated region
    $region30: #{torch_rnn_forward.1} parent=1 // pred_check
      _
    $region31: #{torch_rnn_forward.1} parent=1 // pred_check_branch
      %29 = sbr.rel (0) target = $region33
    $region32: #{torch_rnn_forward.1} parent=1 // pred_region
      _
    $region33: #{torch_rnn_forward.1} parent=1 // pred_fallthru
      _
    %v30 = vld [vmem:[%s3] sm:$0xff]
    %v31 = vld [vmem:[%s3 + $0x8] sm:$0xff]
    %v32 = vld [vmem:[%s3 + $0x10] sm:$0xff]
    %v33 = vld [vmem:[%s3 + $0x18] sm:$0xff]
    %v34 = vld [vmem:[%s3 + $0x20] sm:$0xff]
    %v35 = vld [vmem:[%s3 + $0x28] sm:$0xff]
    %v36 = vld [vmem:[%s3 + $0x30] sm:$0xff]
    %v37 = vld [vmem:[%s3 + $0x38] sm:$0xff]
    %v38 = vld [vmem:[%s3 + $0x40] sm:$0xff]
    %v39 = vld [vmem:[%s3 + $0x48] sm:$0xff]
    %v40 = vld [vmem:[%s3 + $0x50] sm:$0xff]
    %v41 = vld [vmem:[%s3 + $0x58] sm:$0xff]
    %v42 = vld [vmem:[%s3 + $0x60] sm:$0xff]
    %v43 = vld [vmem:[%s3 + $0x68] sm:$0xff]
    %v44 = vld [vmem:[%s3 + $0x70] sm:$0xff]
    %v45 = vld [vmem:[%s3 + $0x78] sm:$0xff]
    %v46 = vld [vmem:[%s2] sm:$0x3]
    %v47 = vld [vmem:[%s0] sm:$0xff]
    %v48 = vld [vmem:[%s0 + $0x8] sm:$0xff]
    %v49 = vld [vmem:[%s1] sm:$0xff]
    %v50 = vld [vmem:[%s1 + $0x8] sm:$0xff]
    %v51 = vld [vmem:[%s1 + $0x10] sm:$0xff]
    %v52 = vld [vmem:[%s1 + $0x18] sm:$0xff]
    %v54 = vperm.slane %v46, 0
    %v55 = vperm.slane %v46, 1
    %vm58 = vcmask 130048
    %v60 = vsel %vm58, %v47, 0
    %v63 = vsel %vm58, %v48, 0
    %65 = vmatpush.msra.mxu0 0.0
    %66 = vmatpush.msra.mxu0 0.0
    %67 = vmatpush.msra.mxu0 0.0
    %68 = vmatpush.msra.mxu0 0.0
    %69 = vmatpush.msra.mxu0 0.0
    %70 = vmatpush.msra.mxu0 0.0
    %71 = vmatpush.msra.mxu0 0.0
    %72 = vmatpush.msra.mxu0 0.0
    %73 = vmatpush.msra.mxu0 0.0
    %74 = vmatpush.msra.mxu0 0.0
    %75 = vmatpush.msra.mxu0 0.0
    %76 = vmatpush.msra.mxu0 0.0
    %77 = vmatpush.msra.mxu0 0.0
    %78 = vmatpush.msra.mxu0 0.0
    %79 = vmatpush.msra.mxu0 %v51
    %80 = vmatpush.msra.mxu0 %v49
    %81 = vmatmul.f32.gmra.mxu0 %v60
    %v82 = vpop.f32.mrf.mxu0
    %v83 = vadd.f32 %v54, %v82
    %84 = vmatmul.f32.gmra.mxu0 %v63
    %v85 = vpop.f32.mrf.mxu0
    %v86 = vadd.f32 %v54, %v85
    %87 = vdwg.mxu0
    %88 = vmatpush.msra.mxu0 0.0
    %89 = vmatpush.msra.mxu0 0.0
    %90 = vmatpush.msra.mxu0 0.0
    %91 = vmatpush.msra.mxu0 0.0
    %92 = vmatpush.msra.mxu0 0.0
    %93 = vmatpush.msra.mxu0 0.0
    %94 = vmatpush.msra.mxu0 0.0
    %95 = vmatpush.msra.mxu0 0.0
    %96 = vmatpush.msra.mxu0 0.0
    %97 = vmatpush.msra.mxu0 0.0
    %98 = vmatpush.msra.mxu0 0.0
    %99 = vmatpush.msra.mxu0 0.0
    %100 = vmatpush.msra.mxu0 0.0
    %101 = vmatpush.msra.mxu0 0.0
    %102 = vmatpush.msra.mxu0 %v52
    %103 = vmatpush.msra.mxu0 %v50
    %104 = vmatmul.f32.gmra.mxu0 %v60
    %v105 = vpop.f32.mrf.mxu0
    %v106 = vadd.f32 %v55, %v105
    %107 = vmatmul.f32.gmra.mxu0 %v63
    %v108 = vpop.f32.mrf.mxu0
    %v109 = vadd.f32 %v55, %v108
    %110 = vdwg.mxu0
    %v111 = vlaneseq
    %v112 = vand.u32 %v111, 127
    %vm113 = vcmp.lt.s32.totalorder %v112, 32
    %v114 = vsel %vm113, 1, 0
    %v115 = vcvt.s32.f32 %v114
    %v116 = vxor.u32 %v83, 2147483648
    %v117 = vxor.u32 %v106, 2147483648
    %v118 = vmul.f32 %v116, 1.442695
    %v119 = vpow.pop %v118
    %v120 = vmul.f32 %v117, 1.442695
    %v121 = vpow.pop %v120
    %v122 = vadd.f32 %v119, 1.0
    %v123 = vadd.f32 %v121, 1.0
    %v124 = vrcp.pop %v122
    %v125 = vmul.f32 %v122, %v124
    %v126 = vsub.f32 1.0, %v125
    %v127 = vmul.f32 %v124, %v126
    %v128 = vadd.f32 %v124, %v127
    %vm129 = vweird.f32 %v122
    %vm130 = vweird.f32 %v124
    %vm131 = vmor %vm129, %vm130
    %v132 = vsel %vm131, %v124, %v128
    %v133 = vand.u32 2147483647, %v122
    %vm134 = vcmp.eq.f32.partialorder %v133, 8.507059e+37
    %v135 = vand.u32 %v122, 2147483648
    %v136 = vor.u32 1.1754944e-38, %v135
    %v137 = vsel %vm134, %v136, %v132
    %v138 = vmul.f32 1.0, %v137
    %v139 = vrcp.pop %v123
    %v140 = vmul.f32 %v123, %v139
    %v141 = vsub.f32 1.0, %v140
    %v142 = vmul.f32 %v139, %v141
    %v143 = vadd.f32 %v139, %v142
    %vm144 = vweird.f32 %v123
    %vm145 = vweird.f32 %v139
    %vm146 = vmor %vm144, %vm145
    %v147 = vsel %vm146, %v139, %v143
    %v148 = vand.u32 2147483647, %v123
    %vm149 = vcmp.eq.f32.partialorder %v148, 8.507059e+37
    %v150 = vand.u32 %v123, 2147483648
    %v151 = vor.u32 1.1754944e-38, %v150
    %v152 = vsel %vm149, %v151, %v147
    %v153 = vmul.f32 1.0, %v152
    %v154 = vtanh.pop %v106
    %v155 = vmul.f32 %v138, 0.0
    %v156 = vmul.f32 %v138, %v154
    %158 = vrot.lane.b32.xlu0 %v156, 64
    %v159 = vpop.permute.xlu0 %158
    %v161 = vadd.f32 %v155, %v159
    %v162 = vtanh.pop %v161
    %v163 = vmul.f32 %v153, %v162
    %165 = vrot.lane.b32.xlu0 %v115, 64
    %v166 = vpop.permute.xlu0 %165
    %v168 = vmul.f32 %v163, %v166
    %v169 = vmul.f32 %v161, %v166
    %171 = vrot.lane.b32.xlu0 %v168, 64
    %v172 = vpop.permute.xlu0 %171
    %v175 = vrot.slane %v83, 2
    %v176 = vrot.slane %v106, 2
    %vm179 = vcmask 523264
    %v180 = vsel %vm179, %v172, 0
    %182 = vmatpush.msra.mxu0 0.0
    %183 = vmatpush.msra.mxu0 0.0
    %184 = vmatpush.msra.mxu0 0.0
    %185 = vmatpush.msra.mxu0 0.0
    %186 = vmatpush.msra.mxu0 0.0
    %187 = vmatpush.msra.mxu0 0.0
    %188 = vmatpush.msra.mxu0 0.0
    %189 = vmatpush.msra.mxu0 0.0
    %190 = vmatpush.msra.mxu0 %v44
    %191 = vmatpush.msra.mxu0 %v42
    %192 = vmatpush.msra.mxu0 %v40
    %193 = vmatpush.msra.mxu0 %v38
    %194 = vmatpush.msra.mxu0 %v36
    %195 = vmatpush.msra.mxu0 %v34
    %196 = vmatpush.msra.mxu0 %v32
    %197 = vmatpush.msra.mxu0 %v30
    %198 = vmatmul.f32.gmra.mxu0 %v180
    %v199 = vpop.f32.mrf.mxu0
    %v200 = vadd.f32 %v175, %v199
    %201 = vdwg.mxu0
    %202 = vmatpush.msra.mxu0 0.0
    %203 = vmatpush.msra.mxu0 0.0
    %204 = vmatpush.msra.mxu0 0.0
    %205 = vmatpush.msra.mxu0 0.0
    %206 = vmatpush.msra.mxu0 0.0
    %207 = vmatpush.msra.mxu0 0.0
    %208 = vmatpush.msra.mxu0 0.0
    %209 = vmatpush.msra.mxu0 0.0
    %210 = vmatpush.msra.mxu0 %v45
    %211 = vmatpush.msra.mxu0 %v43
    %212 = vmatpush.msra.mxu0 %v41
    %213 = vmatpush.msra.mxu0 %v39
    %214 = vmatpush.msra.mxu0 %v37
    %215 = vmatpush.msra.mxu0 %v35
    %216 = vmatpush.msra.mxu0 %v33
    %217 = vmatpush.msra.mxu0 %v31
    %218 = vmatmul.f32.gmra.mxu0 %v180
    %v219 = vpop.f32.mrf.mxu0
    %v220 = vadd.f32 %v176, %v219
    %221 = vdwg.mxu0
    %v222 = vxor.u32 %v200, 2147483648
    %v223 = vxor.u32 %v220, 2147483648
    %v224 = vmul.f32 %v222, 1.442695
    %v225 = vpow.pop %v224
    %v226 = vmul.f32 %v223, 1.442695
    %v227 = vpow.pop %v226
    %v228 = vadd.f32 %v225, 1.0
    %v229 = vadd.f32 %v227, 1.0
    %v230 = vrcp.pop %v228
    %v231 = vmul.f32 %v228, %v230
    %v232 = vsub.f32 1.0, %v231
    %v233 = vmul.f32 %v230, %v232
    %v234 = vadd.f32 %v230, %v233
    %vm235 = vweird.f32 %v228
    %vm236 = vweird.f32 %v230
    %vm237 = vmor %vm235, %vm236
    %v238 = vsel %vm237, %v230, %v234
    %v239 = vand.u32 2147483647, %v228
    %vm240 = vcmp.eq.f32.partialorder %v239, 8.507059e+37
    %v241 = vand.u32 %v228, 2147483648
    %v242 = vor.u32 1.1754944e-38, %v241
    %v243 = vsel %vm240, %v242, %v238
    %v244 = vmul.f32 1.0, %v243
    %v245 = vrcp.pop %v229
    %v246 = vmul.f32 %v229, %v245
    %v247 = vsub.f32 1.0, %v246
    %v248 = vmul.f32 %v245, %v247
    %v249 = vadd.f32 %v245, %v248
    %vm250 = vweird.f32 %v229
    %vm251 = vweird.f32 %v245
    %vm252 = vmor %vm250, %vm251
    %v253 = vsel %vm252, %v245, %v249
    %v254 = vand.u32 2147483647, %v229
    %vm255 = vcmp.eq.f32.partialorder %v254, 8.507059e+37
    %v256 = vand.u32 %v229, 2147483648
    %v257 = vor.u32 1.1754944e-38, %v256
    %v258 = vsel %vm255, %v257, %v253
    %v259 = vmul.f32 1.0, %v258
    %v260 = vtanh.pop %v220
    %v261 = vmul.f32 %v244, %v169
    %v262 = vmul.f32 %v244, %v260
    %264 = vrot.lane.b32.xlu0 %v262, 64
    %v265 = vpop.permute.xlu0 %264
    %v267 = vadd.f32 %v261, %v265
    %v268 = vtanh.pop %v267
    %v269 = vmul.f32 %v259, %v268
    %271 = vrot.lane.b32.xlu0 %v269, 64
    %v272 = vpop.permute.xlu0 %271
    %v273 = vrot.slane %v83, 4
    %v274 = vrot.slane %v106, 4
    %v277 = vsel %vm179, %v272, 0
    %279 = vmatpush.msra.mxu0 0.0
    %280 = vmatpush.msra.mxu0 0.0
    %281 = vmatpush.msra.mxu0 0.0
    %282 = vmatpush.msra.mxu0 0.0
    %283 = vmatpush.msra.mxu0 0.0
    %284 = vmatpush.msra.mxu0 0.0
    %285 = vmatpush.msra.mxu0 0.0
    %286 = vmatpush.msra.mxu0 0.0
    %287 = vmatpush.msra.mxu0 %v44
    %288 = vmatpush.msra.mxu0 %v42
    %289 = vmatpush.msra.mxu0 %v40
    %290 = vmatpush.msra.mxu0 %v38
    %291 = vmatpush.msra.mxu0 %v36
    %292 = vmatpush.msra.mxu0 %v34
    %293 = vmatpush.msra.mxu0 %v32
    %294 = vmatpush.msra.mxu0 %v30
    %295 = vmatmul.f32.gmra.mxu0 %v277
    %v296 = vpop.f32.mrf.mxu0
    %v297 = vadd.f32 %v273, %v296
    %298 = vdwg.mxu0
    %299 = vmatpush.msra.mxu0 0.0
    %300 = vmatpush.msra.mxu0 0.0
    %301 = vmatpush.msra.mxu0 0.0
    %302 = vmatpush.msra.mxu0 0.0
    %303 = vmatpush.msra.mxu0 0.0
    %304 = vmatpush.msra.mxu0 0.0
    %305 = vmatpush.msra.mxu0 0.0
    %306 = vmatpush.msra.mxu0 0.0
    %307 = vmatpush.msra.mxu0 %v45
    %308 = vmatpush.msra.mxu0 %v43
    %309 = vmatpush.msra.mxu0 %v41
    %310 = vmatpush.msra.mxu0 %v39
    %311 = vmatpush.msra.mxu0 %v37
    %312 = vmatpush.msra.mxu0 %v35
    %313 = vmatpush.msra.mxu0 %v33
    %314 = vmatpush.msra.mxu0 %v31
    %315 = vmatmul.f32.gmra.mxu0 %v277
    %v316 = vpop.f32.mrf.mxu0
    %v317 = vadd.f32 %v274, %v316
    %318 = vdwg.mxu0
    %v319 = vxor.u32 %v297, 2147483648
    %v320 = vxor.u32 %v317, 2147483648
    %v321 = vmul.f32 %v319, 1.442695
    %v322 = vpow.pop %v321
    %v323 = vmul.f32 %v320, 1.442695
    %v324 = vpow.pop %v323
    %v325 = vadd.f32 %v322, 1.0
    %v326 = vadd.f32 %v324, 1.0
    %v327 = vrcp.pop %v325
    %v328 = vmul.f32 %v325, %v327
    %v329 = vsub.f32 1.0, %v328
    %v330 = vmul.f32 %v327, %v329
    %v331 = vadd.f32 %v327, %v330
    %vm332 = vweird.f32 %v325
    %vm333 = vweird.f32 %v327
    %vm334 = vmor %vm332, %vm333
    %v335 = vsel %vm334, %v327, %v331
    %v336 = vand.u32 2147483647, %v325
    %vm337 = vcmp.eq.f32.partialorder %v336, 8.507059e+37
    %v338 = vand.u32 %v325, 2147483648
    %v339 = vor.u32 1.1754944e-38, %v338
    %v340 = vsel %vm337, %v339, %v335
    %v341 = vmul.f32 1.0, %v340
    %v342 = vrcp.pop %v326
    %v343 = vmul.f32 %v326, %v342
    %v344 = vsub.f32 1.0, %v343
    %v345 = vmul.f32 %v342, %v344
    %v346 = vadd.f32 %v342, %v345
    %vm347 = vweird.f32 %v326
    %vm348 = vweird.f32 %v342
    %vm349 = vmor %vm347, %vm348
    %v350 = vsel %vm349, %v342, %v346
    %v351 = vand.u32 2147483647, %v326
    %vm352 = vcmp.eq.f32.partialorder %v351, 8.507059e+37
    %v353 = vand.u32 %v326, 2147483648
    %v354 = vor.u32 1.1754944e-38, %v353
    %v355 = vsel %vm352, %v354, %v350
    %v356 = vmul.f32 1.0, %v355
    %v357 = vtanh.pop %v317
    %v358 = vmul.f32 %v341, %v267
    %v359 = vmul.f32 %v341, %v357
    %361 = vrot.lane.b32.xlu0 %v359, 64
    %v362 = vpop.permute.xlu0 %361
    %v364 = vadd.f32 %v358, %v362
    %v365 = vtanh.pop %v364
    %v366 = vmul.f32 %v356, %v365
    %368 = vrot.lane.b32.xlu0 %v366, 64
    %v369 = vpop.permute.xlu0 %368
    %v370 = vrot.slane %v83, 6
    %v371 = vrot.slane %v106, 6
    %v374 = vsel %vm179, %v369, 0
    %376 = vmatpush.msra.mxu0 0.0
    %377 = vmatpush.msra.mxu0 0.0
    %378 = vmatpush.msra.mxu0 0.0
    %379 = vmatpush.msra.mxu0 0.0
    %380 = vmatpush.msra.mxu0 0.0
    %381 = vmatpush.msra.mxu0 0.0
    %382 = vmatpush.msra.mxu0 0.0
    %383 = vmatpush.msra.mxu0 0.0
    %384 = vmatpush.msra.mxu0 %v44
    %385 = vmatpush.msra.mxu0 %v42
    %386 = vmatpush.msra.mxu0 %v40
    %387 = vmatpush.msra.mxu0 %v38
    %388 = vmatpush.msra.mxu0 %v36
    %389 = vmatpush.msra.mxu0 %v34
    %390 = vmatpush.msra.mxu0 %v32
    %391 = vmatpush.msra.mxu0 %v30
    %392 = vmatmul.f32.gmra.mxu0 %v374
    %v393 = vpop.f32.mrf.mxu0
    %v394 = vadd.f32 %v370, %v393
    %395 = vdwg.mxu0
    %396 = vmatpush.msra.mxu0 0.0
    %397 = vmatpush.msra.mxu0 0.0
    %398 = vmatpush.msra.mxu0 0.0
    %399 = vmatpush.msra.mxu0 0.0
    %400 = vmatpush.msra.mxu0 0.0
    %401 = vmatpush.msra.mxu0 0.0
    %402 = vmatpush.msra.mxu0 0.0
    %403 = vmatpush.msra.mxu0 0.0
    %404 = vmatpush.msra.mxu0 %v45
    %405 = vmatpush.msra.mxu0 %v43
    %406 = vmatpush.msra.mxu0 %v41
    %407 = vmatpush.msra.mxu0 %v39
    %408 = vmatpush.msra.mxu0 %v37
    %409 = vmatpush.msra.mxu0 %v35
    %410 = vmatpush.msra.mxu0 %v33
    %411 = vmatpush.msra.mxu0 %v31
    %412 = vmatmul.f32.gmra.mxu0 %v374
    %v413 = vpop.f32.mrf.mxu0
    %v414 = vadd.f32 %v371, %v413
    %415 = vdwg.mxu0
    %v416 = vxor.u32 %v394, 2147483648
    %v417 = vxor.u32 %v414, 2147483648
    %v418 = vmul.f32 %v416, 1.442695
    %v419 = vpow.pop %v418
    %v420 = vmul.f32 %v417, 1.442695
    %v421 = vpow.pop %v420
    %v422 = vadd.f32 %v419, 1.0
    %v423 = vadd.f32 %v421, 1.0
    %v424 = vrcp.pop %v422
    %v425 = vmul.f32 %v422, %v424
    %v426 = vsub.f32 1.0, %v425
    %v427 = vmul.f32 %v424, %v426
    %v428 = vadd.f32 %v424, %v427
    %vm429 = vweird.f32 %v422
    %vm430 = vweird.f32 %v424
    %vm431 = vmor %vm429, %vm430
    %v432 = vsel %vm431, %v424, %v428
    %v433 = vand.u32 2147483647, %v422
    %vm434 = vcmp.eq.f32.partialorder %v433, 8.507059e+37
    %v435 = vand.u32 %v422, 2147483648
    %v436 = vor.u32 1.1754944e-38, %v435
    %v437 = vsel %vm434, %v436, %v432
    %v438 = vmul.f32 1.0, %v437
    %v439 = vrcp.pop %v423
    %v440 = vmul.f32 %v423, %v439
    %v441 = vsub.f32 1.0, %v440
    %v442 = vmul.f32 %v439, %v441
    %v443 = vadd.f32 %v439, %v442
    %vm444 = vweird.f32 %v423
    %vm445 = vweird.f32 %v439
    %vm446 = vmor %vm444, %vm445
    %v447 = vsel %vm446, %v439, %v443
    %v448 = vand.u32 2147483647, %v423
    %vm449 = vcmp.eq.f32.partialorder %v448, 8.507059e+37
    %v450 = vand.u32 %v423, 2147483648
    %v451 = vor.u32 1.1754944e-38, %v450
    %v452 = vsel %vm449, %v451, %v447
    %v453 = vmul.f32 1.0, %v452
    %v454 = vtanh.pop %v414
    %v455 = vmul.f32 %v438, %v364
    %v456 = vmul.f32 %v438, %v454
    %458 = vrot.lane.b32.xlu0 %v456, 64
    %v459 = vpop.permute.xlu0 %458
    %v461 = vadd.f32 %v455, %v459
    %v462 = vtanh.pop %v461
    %v463 = vmul.f32 %v453, %v462
    %465 = vrot.lane.b32.xlu0 %v463, 64
    %v466 = vpop.permute.xlu0 %465
    %v467 = vsel %vm179, %v466, 0
    %469 = vmatpush.msra.mxu0 0.0
    %470 = vmatpush.msra.mxu0 0.0
    %471 = vmatpush.msra.mxu0 0.0
    %472 = vmatpush.msra.mxu0 0.0
    %473 = vmatpush.msra.mxu0 0.0
    %474 = vmatpush.msra.mxu0 0.0
    %475 = vmatpush.msra.mxu0 0.0
    %476 = vmatpush.msra.mxu0 0.0
    %477 = vmatpush.msra.mxu0 %v44
    %478 = vmatpush.msra.mxu0 %v42
    %479 = vmatpush.msra.mxu0 %v40
    %480 = vmatpush.msra.mxu0 %v38
    %481 = vmatpush.msra.mxu0 %v36
    %482 = vmatpush.msra.mxu0 %v34
    %483 = vmatpush.msra.mxu0 %v32
    %484 = vmatpush.msra.mxu0 %v30
    %485 = vmatmul.f32.gmra.mxu0 %v467
    %v486 = vpop.f32.mrf.mxu0
    %v487 = vadd.f32 %v86, %v486
    %488 = vdwg.mxu0
    %489 = vmatpush.msra.mxu0 0.0
    %490 = vmatpush.msra.mxu0 0.0
    %491 = vmatpush.msra.mxu0 0.0
    %492 = vmatpush.msra.mxu0 0.0
    %493 = vmatpush.msra.mxu0 0.0
    %494 = vmatpush.msra.mxu0 0.0
    %495 = vmatpush.msra.mxu0 0.0
    %496 = vmatpush.msra.mxu0 0.0
    %497 = vmatpush.msra.mxu0 %v45
    %498 = vmatpush.msra.mxu0 %v43
    %499 = vmatpush.msra.mxu0 %v41
    %500 = vmatpush.msra.mxu0 %v39
    %501 = vmatpush.msra.mxu0 %v37
    %502 = vmatpush.msra.mxu0 %v35
    %503 = vmatpush.msra.mxu0 %v33
    %504 = vmatpush.msra.mxu0 %v31
    %505 = vmatmul.f32.gmra.mxu0 %v467
    %v506 = vpop.f32.mrf.mxu0
    %v507 = vadd.f32 %v109, %v506
    %508 = vdwg.mxu0
    %v509 = vxor.u32 %v487, 2147483648
    %v510 = vxor.u32 %v507, 2147483648
    %v511 = vmul.f32 %v509, 1.442695
    %v512 = vpow.pop %v511
    %v513 = vmul.f32 %v510, 1.442695
    %v514 = vpow.pop %v513
    %v515 = vadd.f32 %v512, 1.0
    %v516 = vadd.f32 %v514, 1.0
    %v517 = vrcp.pop %v515
    %v518 = vmul.f32 %v515, %v517
    %v519 = vsub.f32 1.0, %v518
    %v520 = vmul.f32 %v517, %v519
    %v521 = vadd.f32 %v517, %v520
    %vm522 = vweird.f32 %v515
    %vm523 = vweird.f32 %v517
    %vm524 = vmor %vm522, %vm523
    %v525 = vsel %vm524, %v517, %v521
    %v526 = vand.u32 2147483647, %v515
    %vm527 = vcmp.eq.f32.partialorder %v526, 8.507059e+37
    %v528 = vand.u32 %v515, 2147483648
    %v529 = vor.u32 1.1754944e-38, %v528
    %v530 = vsel %vm527, %v529, %v525
    %v531 = vmul.f32 1.0, %v530
    %v532 = vrcp.pop %v516
    %v533 = vmul.f32 %v516, %v532
    %v534 = vsub.f32 1.0, %v533
    %v535 = vmul.f32 %v532, %v534
    %v536 = vadd.f32 %v532, %v535
    %vm537 = vweird.f32 %v516
    %vm538 = vweird.f32 %v532
    %vm539 = vmor %vm537, %vm538
    %v540 = vsel %vm539, %v532, %v536
    %v541 = vand.u32 2147483647, %v516
    %vm542 = vcmp.eq.f32.partialorder %v541, 8.507059e+37
    %v543 = vand.u32 %v516, 2147483648
    %v544 = vor.u32 1.1754944e-38, %v543
    %v545 = vsel %vm542, %v544, %v540
    %v546 = vmul.f32 1.0, %v545
    %v547 = vtanh.pop %v507
    %v548 = vmul.f32 %v531, %v461
    %v549 = vmul.f32 %v531, %v547
    %551 = vrot.lane.b32.xlu0 %v549, 64
    %v552 = vpop.permute.xlu0 %551
    %v554 = vadd.f32 %v548, %v552
    %v555 = vtanh.pop %v554
    %v556 = vmul.f32 %v546, %v555
    %558 = vrot.lane.b32.xlu0 %v556, 64
    %v559 = vpop.permute.xlu0 %558
    %v562 = vrot.slane %v86, 2
    %v563 = vrot.slane %v109, 2
    %v566 = vsel %vm179, %v559, 0
    %568 = vmatpush.msra.mxu0 0.0
    %569 = vmatpush.msra.mxu0 0.0
    %570 = vmatpush.msra.mxu0 0.0
    %571 = vmatpush.msra.mxu0 0.0
    %572 = vmatpush.msra.mxu0 0.0
    %573 = vmatpush.msra.mxu0 0.0
    %574 = vmatpush.msra.mxu0 0.0
    %575 = vmatpush.msra.mxu0 0.0
    %576 = vmatpush.msra.mxu0 %v44
    %577 = vmatpush.msra.mxu0 %v42
    %578 = vmatpush.msra.mxu0 %v40
    %579 = vmatpush.msra.mxu0 %v38
    %580 = vmatpush.msra.mxu0 %v36
    %581 = vmatpush.msra.mxu0 %v34
    %582 = vmatpush.msra.mxu0 %v32
    %583 = vmatpush.msra.mxu0 %v30
    %584 = vmatmul.f32.gmra.mxu0 %v566
    %v585 = vpop.f32.mrf.mxu0
    %v586 = vadd.f32 %v562, %v585
    %587 = vdwg.mxu0
    %588 = vmatpush.msra.mxu0 0.0
    %589 = vmatpush.msra.mxu0 0.0
    %590 = vmatpush.msra.mxu0 0.0
    %591 = vmatpush.msra.mxu0 0.0
    %592 = vmatpush.msra.mxu0 0.0
    %593 = vmatpush.msra.mxu0 0.0
    %594 = vmatpush.msra.mxu0 0.0
    %595 = vmatpush.msra.mxu0 0.0
    %596 = vmatpush.msra.mxu0 %v45
    %597 = vmatpush.msra.mxu0 %v43
    %598 = vmatpush.msra.mxu0 %v41
    %599 = vmatpush.msra.mxu0 %v39
    %600 = vmatpush.msra.mxu0 %v37
    %601 = vmatpush.msra.mxu0 %v35
    %602 = vmatpush.msra.mxu0 %v33
    %603 = vmatpush.msra.mxu0 %v31
    %604 = vmatmul.f32.gmra.mxu0 %v566
    %v605 = vpop.f32.mrf.mxu0
    %v606 = vadd.f32 %v563, %v605
    %607 = vdwg.mxu0
    %v608 = vxor.u32 %v586, 2147483648
    %v609 = vxor.u32 %v606, 2147483648
    %v610 = vmul.f32 %v608, 1.442695
    %v611 = vpow.pop %v610
    %v612 = vmul.f32 %v609, 1.442695
    %v613 = vpow.pop %v612
    %v614 = vadd.f32 %v611, 1.0
    %v615 = vadd.f32 %v613, 1.0
    %v616 = vrcp.pop %v614
    %v617 = vmul.f32 %v614, %v616
    %v618 = vsub.f32 1.0, %v617
    %v619 = vmul.f32 %v616, %v618
    %v620 = vadd.f32 %v616, %v619
    %vm621 = vweird.f32 %v614
    %vm622 = vweird.f32 %v616
    %vm623 = vmor %vm621, %vm622
    %v624 = vsel %vm623, %v616, %v620
    %v625 = vand.u32 2147483647, %v614
    %vm626 = vcmp.eq.f32.partialorder %v625, 8.507059e+37
    %v627 = vand.u32 %v614, 2147483648
    %v628 = vor.u32 1.1754944e-38, %v627
    %v629 = vsel %vm626, %v628, %v624
    %v630 = vmul.f32 1.0, %v629
    %v631 = vrcp.pop %v615
    %v632 = vmul.f32 %v615, %v631
    %v633 = vsub.f32 1.0, %v632
    %v634 = vmul.f32 %v631, %v633
    %v635 = vadd.f32 %v631, %v634
    %vm636 = vweird.f32 %v615
    %vm637 = vweird.f32 %v631
    %vm638 = vmor %vm636, %vm637
    %v639 = vsel %vm638, %v631, %v635
    %v640 = vand.u32 2147483647, %v615
    %vm641 = vcmp.eq.f32.partialorder %v640, 8.507059e+37
    %v642 = vand.u32 %v615, 2147483648
    %v643 = vor.u32 1.1754944e-38, %v642
    %v644 = vsel %vm641, %v643, %v639
    %v645 = vmul.f32 1.0, %v644
    %v646 = vtanh.pop %v606
    %v647 = vmul.f32 %v630, %v554
    %v648 = vmul.f32 %v630, %v646
    %650 = vrot.lane.b32.xlu0 %v648, 64
    %v651 = vpop.permute.xlu0 %650
    %v653 = vadd.f32 %v647, %v651
    %v654 = vtanh.pop %v653
    %v655 = vmul.f32 %v645, %v654
    %657 = vrot.lane.b32.xlu0 %v655, 64
    %v658 = vpop.permute.xlu0 %657
    %v659 = vrot.slane %v86, 4
    %v660 = vrot.slane %v109, 4
    %v663 = vsel %vm179, %v658, 0
    %665 = vmatpush.msra.mxu0 0.0
    %666 = vmatpush.msra.mxu0 0.0
    %667 = vmatpush.msra.mxu0 0.0
    %668 = vmatpush.msra.mxu0 0.0
    %669 = vmatpush.msra.mxu0 0.0
    %670 = vmatpush.msra.mxu0 0.0
    %671 = vmatpush.msra.mxu0 0.0
    %672 = vmatpush.msra.mxu0 0.0
    %673 = vmatpush.msra.mxu0 %v44
    %674 = vmatpush.msra.mxu0 %v42
    %675 = vmatpush.msra.mxu0 %v40
    %676 = vmatpush.msra.mxu0 %v38
    %677 = vmatpush.msra.mxu0 %v36
    %678 = vmatpush.msra.mxu0 %v34
    %679 = vmatpush.msra.mxu0 %v32
    %680 = vmatpush.msra.mxu0 %v30
    %681 = vmatmul.f32.gmra.mxu0 %v663
    %v682 = vpop.f32.mrf.mxu0
    %v683 = vadd.f32 %v659, %v682
    %684 = vdwg.mxu0
    %685 = vmatpush.msra.mxu0 0.0
    %686 = vmatpush.msra.mxu0 0.0
    %687 = vmatpush.msra.mxu0 0.0
    %688 = vmatpush.msra.mxu0 0.0
    %689 = vmatpush.msra.mxu0 0.0
    %690 = vmatpush.msra.mxu0 0.0
    %691 = vmatpush.msra.mxu0 0.0
    %692 = vmatpush.msra.mxu0 0.0
    %693 = vmatpush.msra.mxu0 %v45
    %694 = vmatpush.msra.mxu0 %v43
    %695 = vmatpush.msra.mxu0 %v41
    %696 = vmatpush.msra.mxu0 %v39
    %697 = vmatpush.msra.mxu0 %v37
    %698 = vmatpush.msra.mxu0 %v35
    %699 = vmatpush.msra.mxu0 %v33
    %700 = vmatpush.msra.mxu0 %v31
    %701 = vmatmul.f32.gmra.mxu0 %v663
    %v702 = vpop.f32.mrf.mxu0
    %v703 = vadd.f32 %v660, %v702
    %704 = vdwg.mxu0
    %v705 = vxor.u32 %v683, 2147483648
    %v706 = vxor.u32 %v703, 2147483648
    %v707 = vmul.f32 %v705, 1.442695
    %v708 = vpow.pop %v707
    %v709 = vmul.f32 %v706, 1.442695
    %v710 = vpow.pop %v709
    %v711 = vadd.f32 %v708, 1.0
    %v712 = vadd.f32 %v710, 1.0
    %v713 = vrcp.pop %v711
    %v714 = vmul.f32 %v711, %v713
    %v715 = vsub.f32 1.0, %v714
    %v716 = vmul.f32 %v713, %v715
    %v717 = vadd.f32 %v713, %v716
    %vm718 = vweird.f32 %v711
    %vm719 = vweird.f32 %v713
    %vm720 = vmor %vm718, %vm719
    %v721 = vsel %vm720, %v713, %v717
    %v722 = vand.u32 2147483647, %v711
    %vm723 = vcmp.eq.f32.partialorder %v722, 8.507059e+37
    %v724 = vand.u32 %v711, 2147483648
    %v725 = vor.u32 1.1754944e-38, %v724
    %v726 = vsel %vm723, %v725, %v721
    %v727 = vmul.f32 1.0, %v726
    %v728 = vrcp.pop %v712
    %v729 = vmul.f32 %v712, %v728
    %v730 = vsub.f32 1.0, %v729
    %v731 = vmul.f32 %v728, %v730
    %v732 = vadd.f32 %v728, %v731
    %vm733 = vweird.f32 %v712
    %vm734 = vweird.f32 %v728
    %vm735 = vmor %vm733, %vm734
    %v736 = vsel %vm735, %v728, %v732
    %v737 = vand.u32 2147483647, %v712
    %vm738 = vcmp.eq.f32.partialorder %v737, 8.507059e+37
    %v739 = vand.u32 %v712, 2147483648
    %v740 = vor.u32 1.1754944e-38, %v739
    %v741 = vsel %vm738, %v740, %v736
    %v742 = vmul.f32 1.0, %v741
    %v743 = vtanh.pop %v703
    %v744 = vmul.f32 %v727, %v653
    %v745 = vmul.f32 %v727, %v743
    %747 = vrot.lane.b32.xlu0 %v745, 64
    %v748 = vpop.permute.xlu0 %747
    %v750 = vadd.f32 %v744, %v748
    %v751 = vtanh.pop %v750
    %v752 = vmul.f32 %v742, %v751
    %754 = vrot.lane.b32.xlu0 %v752, 64
    %v755 = vpop.permute.xlu0 %754
    %v756 = vrot.slane %v86, 6
    %v757 = vrot.slane %v109, 6
    %v760 = vsel %vm179, %v755, 0
    %762 = vmatpush.msra.mxu0 0.0
    %763 = vmatpush.msra.mxu0 0.0
    %764 = vmatpush.msra.mxu0 0.0
    %765 = vmatpush.msra.mxu0 0.0
    %766 = vmatpush.msra.mxu0 0.0
    %767 = vmatpush.msra.mxu0 0.0
    %768 = vmatpush.msra.mxu0 0.0
    %769 = vmatpush.msra.mxu0 0.0
    %770 = vmatpush.msra.mxu0 %v44
    %771 = vmatpush.msra.mxu0 %v42
    %772 = vmatpush.msra.mxu0 %v40
    %773 = vmatpush.msra.mxu0 %v38
    %774 = vmatpush.msra.mxu0 %v36
    %775 = vmatpush.msra.mxu0 %v34
    %776 = vmatpush.msra.mxu0 %v32
    %777 = vmatpush.msra.mxu0 %v30
    %778 = vmatmul.f32.gmra.mxu0 %v760
    %v779 = vpop.f32.mrf.mxu0
    %v780 = vadd.f32 %v756, %v779
    %781 = vdwg.mxu0
    %782 = vmatpush.msra.mxu0 0.0
    %783 = vmatpush.msra.mxu0 0.0
    %784 = vmatpush.msra.mxu0 0.0
    %785 = vmatpush.msra.mxu0 0.0
    %786 = vmatpush.msra.mxu0 0.0
    %787 = vmatpush.msra.mxu0 0.0
    %788 = vmatpush.msra.mxu0 0.0
    %789 = vmatpush.msra.mxu0 0.0
    %790 = vmatpush.msra.mxu0 %v45
    %791 = vmatpush.msra.mxu0 %v43
    %792 = vmatpush.msra.mxu0 %v41
    %793 = vmatpush.msra.mxu0 %v39
    %794 = vmatpush.msra.mxu0 %v37
    %795 = vmatpush.msra.mxu0 %v35
    %796 = vmatpush.msra.mxu0 %v33
    %797 = vmatpush.msra.mxu0 %v31
    %798 = vmatmul.f32.gmra.mxu0 %v760
    %v799 = vpop.f32.mrf.mxu0
    %v800 = vadd.f32 %v757, %v799
    %801 = vdwg.mxu0
    %v802 = vxor.u32 %v780, 2147483648
    %v803 = vxor.u32 %v800, 2147483648
    %v804 = vmul.f32 %v802, 1.442695
    %v805 = vpow.pop %v804
    %v806 = vmul.f32 %v803, 1.442695
    %v807 = vpow.pop %v806
    %v808 = vadd.f32 %v805, 1.0
    %v809 = vadd.f32 %v807, 1.0
    %v810 = vrcp.pop %v808
    %v811 = vmul.f32 %v808, %v810
    %v812 = vsub.f32 1.0, %v811
    %v813 = vmul.f32 %v810, %v812
    %v814 = vadd.f32 %v810, %v813
    %vm815 = vweird.f32 %v808
    %vm816 = vweird.f32 %v810
    %vm817 = vmor %vm815, %vm816
    %v818 = vsel %vm817, %v810, %v814
    %v819 = vand.u32 2147483647, %v808
    %vm820 = vcmp.eq.f32.partialorder %v819, 8.507059e+37
    %v821 = vand.u32 %v808, 2147483648
    %v822 = vor.u32 1.1754944e-38, %v821
    %v823 = vsel %vm820, %v822, %v818
    %v824 = vmul.f32 1.0, %v823
    %v825 = vrcp.pop %v809
    %v826 = vmul.f32 %v809, %v825
    %v827 = vsub.f32 1.0, %v826
    %v828 = vmul.f32 %v825, %v827
    %v829 = vadd.f32 %v825, %v828
    %vm830 = vweird.f32 %v809
    %vm831 = vweird.f32 %v825
    %vm832 = vmor %vm830, %vm831
    %v833 = vsel %vm832, %v825, %v829
    %v834 = vand.u32 2147483647, %v809
    %vm835 = vcmp.eq.f32.partialorder %v834, 8.507059e+37
    %v836 = vand.u32 %v809, 2147483648
    %v837 = vor.u32 1.1754944e-38, %v836
    %v838 = vsel %vm835, %v837, %v833
    %v839 = vmul.f32 1.0, %v838
    %v840 = vtanh.pop %v800
    %v841 = vmul.f32 %v824, %v750
    %v842 = vmul.f32 %v824, %v840
    %844 = vrot.lane.b32.xlu0 %v842, 64
    %v845 = vpop.permute.xlu0 %844
    %v847 = vadd.f32 %v841, %v845
    %v848 = vtanh.pop %v847
    %v849 = vmul.f32 %v839, %v848
    %851 = vrot.lane.b32.xlu0 %v849, 64
    %v852 = vpop.permute.xlu0 %851
    %v853 = vsel %vm179, %v852, 0
    %855 = vmatpush.msra.mxu0 0.0
    %856 = vmatpush.msra.mxu0 0.0
    %857 = vmatpush.msra.mxu0 0.0
    %858 = vmatpush.msra.mxu0 0.0
    %859 = vmatpush.msra.mxu0 0.0
    %860 = vmatpush.msra.mxu0 0.0
    %861 = vmatpush.msra.mxu0 0.0
    %862 = vmatpush.msra.mxu0 0.0
    %863 = vmatpush.msra.mxu0 %v44
    %864 = vmatpush.msra.mxu0 %v42
    %865 = vmatpush.msra.mxu0 %v40
    %866 = vmatpush.msra.mxu0 %v38
    %867 = vmatpush.msra.mxu0 %v36
    %868 = vmatpush.msra.mxu0 %v34
    %869 = vmatpush.msra.mxu0 %v32
    %870 = vmatpush.msra.mxu0 %v30
    %871 = vmatmul.f32.gmra.mxu0 %v853
    %v872 = vpop.f32.mrf.mxu0
    %v873 = vadd.f32 %v54, %v872
    %874 = vdwg.mxu0
    %875 = vmatpush.msra.mxu0 0.0
    %876 = vmatpush.msra.mxu0 0.0
    %877 = vmatpush.msra.mxu0 0.0
    %878 = vmatpush.msra.mxu0 0.0
    %879 = vmatpush.msra.mxu0 0.0
    %880 = vmatpush.msra.mxu0 0.0
    %881 = vmatpush.msra.mxu0 0.0
    %882 = vmatpush.msra.mxu0 0.0
    %883 = vmatpush.msra.mxu0 %v45
    %884 = vmatpush.msra.mxu0 %v43
    %885 = vmatpush.msra.mxu0 %v41
    %886 = vmatpush.msra.mxu0 %v39
    %887 = vmatpush.msra.mxu0 %v37
    %888 = vmatpush.msra.mxu0 %v35
    %889 = vmatpush.msra.mxu0 %v33
    %890 = vmatpush.msra.mxu0 %v31
    %891 = vmatmul.f32.gmra.mxu0 %v853
    %v892 = vpop.f32.mrf.mxu0
    %v893 = vadd.f32 %v55, %v892
    %894 = vdwg.mxu0
    %v895 = vxor.u32 %v873, 2147483648
    %v896 = vxor.u32 %v893, 2147483648
    %v897 = vmul.f32 %v895, 1.442695
    %v898 = vpow.pop %v897
    %v899 = vmul.f32 %v896, 1.442695
    %v900 = vpow.pop %v899
    %v901 = vadd.f32 %v898, 1.0
    %v902 = vadd.f32 %v900, 1.0
    %v903 = vrcp.pop %v901
    %v904 = vmul.f32 %v901, %v903
    %v905 = vsub.f32 1.0, %v904
    %v906 = vmul.f32 %v903, %v905
    %v907 = vadd.f32 %v903, %v906
    %vm908 = vweird.f32 %v901
    %vm909 = vweird.f32 %v903
    %vm910 = vmor %vm908, %vm909
    %v911 = vsel %vm910, %v903, %v907
    %v912 = vand.u32 2147483647, %v901
    %vm913 = vcmp.eq.f32.partialorder %v912, 8.507059e+37
    %v914 = vand.u32 %v901, 2147483648
    %v915 = vor.u32 1.1754944e-38, %v914
    %v916 = vsel %vm913, %v915, %v911
    %v917 = vmul.f32 1.0, %v916
    %v918 = vrcp.pop %v902
    %v919 = vmul.f32 %v902, %v918
    %v920 = vsub.f32 1.0, %v919
    %v921 = vmul.f32 %v918, %v920
    %v922 = vadd.f32 %v918, %v921
    %vm923 = vweird.f32 %v902
    %vm924 = vweird.f32 %v918
    %vm925 = vmor %vm923, %vm924
    %v926 = vsel %vm925, %v918, %v922
    %v927 = vand.u32 2147483647, %v902
    %vm928 = vcmp.eq.f32.partialorder %v927, 8.507059e+37
    %v929 = vand.u32 %v902, 2147483648
    %v930 = vor.u32 1.1754944e-38, %v929
    %v931 = vsel %vm928, %v930, %v926
    %v932 = vmul.f32 1.0, %v931
    %v933 = vtanh.pop %v893
    %v934 = vmul.f32 %v917, %v847
    %v935 = vmul.f32 %v917, %v933
    %937 = vrot.lane.b32.xlu0 %v935, 64
    %v938 = vpop.permute.xlu0 %937
    %v940 = vadd.f32 %v934, %v938
    %v941 = vtanh.pop %v940
    %v942 = vmul.f32 %v932, %v941
    %v943 = vld [vmem:[%s4] sm:$0xff]
    %v944 = vld [vmem:[%s4 + $0x8] sm:$0xff]
    %v945 = vld [vmem:[%s4 + $0x10] sm:$0xff]
    %v946 = vld [vmem:[%s4 + $0x18] sm:$0xff]
    %v947 = vld [vmem:[%s4 + $0x20] sm:$0xff]
    %v948 = vld [vmem:[%s4 + $0x28] sm:$0xff]
    %v949 = vld [vmem:[%s4 + $0x30] sm:$0xff]
    %v950 = vld [vmem:[%s4 + $0x38] sm:$0xff]
    %v951 = vld [vmem:[%s5] sm:$0x1]
    %v953 = vperm.slane %v951, 0
    %956 = vrot.lane.b32.xlu0 %v942, 64
    %v957 = vpop.permute.xlu0 %956
    %v958 = vsel %vm179, %v957, 0
    %960 = vmatpush.msra.mxu0 0.0
    %961 = vmatpush.msra.mxu0 0.0
    %962 = vmatpush.msra.mxu0 0.0
    %963 = vmatpush.msra.mxu0 0.0
    %964 = vmatpush.msra.mxu0 0.0
    %965 = vmatpush.msra.mxu0 0.0
    %966 = vmatpush.msra.mxu0 0.0
    %967 = vmatpush.msra.mxu0 0.0
    %968 = vmatpush.msra.mxu0 %v950
    %969 = vmatpush.msra.mxu0 %v949
    %970 = vmatpush.msra.mxu0 %v948
    %971 = vmatpush.msra.mxu0 %v947
    %972 = vmatpush.msra.mxu0 %v946
    %973 = vmatpush.msra.mxu0 %v945
    %974 = vmatpush.msra.mxu0 %v944
    %975 = vmatpush.msra.mxu0 %v943
    %976 = vmatmul.f32.gmra.mxu0 %v958
    %v977 = vpop.f32.mrf.mxu0
    %v978 = vadd.f32 %v953, %v977
    %979 = vdwg.mxu0
    %v980 = vmax.f32 %v978, 0.0
    %v981 = vld [vmem:[%s6] sm:$0xff]
    %v982 = vld [vmem:[%s6 + $0x8] sm:$0xff]
    %v983 = vld [vmem:[%s6 + $0x10] sm:$0xff]
    %v984 = vld [vmem:[%s6 + $0x18] sm:$0xff]
    %v985 = vld [vmem:[%s6 + $0x20] sm:$0xff]
    %v986 = vld [vmem:[%s6 + $0x28] sm:$0xff]
    %v987 = vld [vmem:[%s6 + $0x30] sm:$0xff]
    %v988 = vld [vmem:[%s6 + $0x38] sm:$0xff]
    %v989 = vld [vmem:[%s7] sm:$0x1]
    %v991 = vperm.slane %v989, 0
    %v994 = vsel %vm179, %v980, 0
    %996 = vmatpush.msra.mxu0 0.0
    %997 = vmatpush.msra.mxu0 0.0
    %998 = vmatpush.msra.mxu0 0.0
    %999 = vmatpush.msra.mxu0 0.0
    %1000 = vmatpush.msra.mxu0 0.0
    %1001 = vmatpush.msra.mxu0 0.0
    %1002 = vmatpush.msra.mxu0 0.0
    %1003 = vmatpush.msra.mxu0 0.0
    %1004 = vmatpush.msra.mxu0 %v988
    %1005 = vmatpush.msra.mxu0 %v987
    %1006 = vmatpush.msra.mxu0 %v986
    %1007 = vmatpush.msra.mxu0 %v985
    %1008 = vmatpush.msra.mxu0 %v984
    %1009 = vmatpush.msra.mxu0 %v983
    %1010 = vmatpush.msra.mxu0 %v982
    %1011 = vmatpush.msra.mxu0 %v981
    %1012 = vmatmul.f32.gmra.mxu0 %v994
    %v1013 = vpop.f32.mrf.mxu0
    %v1014 = vadd.f32 %v991, %v1013
    %1015 = vdwg.mxu0
    %1016 = vst [vmem:[#allocation2] sm:$0x3] %v1014
    // Predicated region
    $region34: #{torch_rnn_forward.1} parent=1 // pred_check
      _
    $region35: #{torch_rnn_forward.1} parent=1 // pred_check_branch
      %1018 = sbr.rel (0) target = $region37
    $region36: #{torch_rnn_forward.1} parent=1 // pred_region
      %1020 = vsyncadd [#allocation3], 0
      %s1022 = sshll.u32 [#allocation2], 4
      %s1023 = int_to_ptr.vmem [resolvable:$true] %s1022
      %s1024 = sshll.u32 %s8, 4
      %s1025 = int_to_ptr.hbm [resolvable:$true] %s1024
      %1027 = dma.vmem_to_hbm [thread:$0]  %s1023, 32, %s1025, [#allocation3]
    $region37: #{torch_rnn_forward.1} parent=1 // pred_fallthru
      _
    // Predicated region
    $region38: #{torch_rnn_forward.1} parent=1 // pred_check
      _
    $region39: #{torch_rnn_forward.1} parent=1 // pred_check_branch
      %1029 = sbr.rel (0) target = $region41
    $region40: #{torch_rnn_forward.1} parent=1 // pred_region
      %1031 = dma.done [#allocation3], 32
    $region41: #{torch_rnn_forward.1} parent=1 // pred_fallthru
      _
    %1032 = vsyncpa [#allocation3], 1

</llo_original>
